<compile_context>
chip_gen: v7x
topology: tpu7x:2x2x1
jax: 0.10.0
libtpu: 0.0.40
codegen_flags: <defaults>
</compile_context>

<pallas_src>
import functools

import jax
import jax.numpy as jnp
from jax.experimental import pallas as pl
from jax.experimental.pallas import tpu as pltpu


C_PAD = 128  # lane-dense padded class dimension


def _round_up(x, m):
    return ((x + m - 1) // m) * m


def gstar_kernel(a_ref, x_ref, w_ref, b_ref, o_ref, acc_ref, *, num_classes):
    """One (row-tile i, contraction-tile k) step of softmax(A @ (X @ W) + b)."""
    k = pl.program_id(1)

    @pl.when(k == 0)
    def _():
        acc_ref[...] = jnp.zeros_like(acc_ref)

    # Small feature transform for this k-slab: [tk, F] @ [F, C_PAD] -> [tk, C_PAD]
    xw = jnp.dot(x_ref[...], w_ref[...], preferred_element_type=jnp.float32)
    # Aggregation for this row tile: [tm, tk] @ [tk, C_PAD], bf16 MXU, f32 accumulate.
    acc_ref[...] += jnp.dot(a_ref[...], xw.astype(a_ref.dtype),
                            preferred_element_type=jnp.float32)

    @pl.when(k == pl.num_programs(1) - 1)
    def _():
        h = acc_ref[...] + b_ref[...]
        # Mask padded class lanes so they contribute zero softmax mass.
        col = jax.lax.broadcasted_iota(jnp.int32, h.shape, dimension=1)
        h = jnp.where(col < num_classes, h, -jnp.inf)
        m = jnp.max(h, axis=-1, keepdims=True)
        e = jnp.exp(h - m)                       # padded lanes -> exp(-inf) = 0
        denom = jnp.sum(e, axis=-1, keepdims=True)
        o_ref[...] = (e * pl.reciprocal(denom, approx=True)).astype(o_ref.dtype)


def gstar_forward(a_norm, feat, w, b, *, tm=256, tk=512):
    n, f = feat.shape
    c = w.shape[1]
    assert a_norm.shape == (n, n)

    # Shrink tiles to the padded problem size for tiny graphs; at the default
    # tm=256 / tk=512 the double-buffered A tiles + resident XW/acc total well
    # under 1 MiB, far below even v7x's 32 MiB scoped-VMEM default.
    tm = min(tm, _round_up(n, 16))
    tk = min(tk, _round_up(n, 128))
    n_rows = _round_up(n, tm)
    n_k = _round_up(n, tk)

    # bf16 at the boundary halves HBM traffic for the memory-bound A stream;
    # accumulation / bias / softmax stay f32 inside the kernel.
    a_p = jnp.zeros((n_rows, n_k), jnp.bfloat16).at[:n, :n].set(
        a_norm.astype(jnp.bfloat16))
    x_p = jnp.zeros((n_k, f), jnp.bfloat16).at[:n, :].set(
        feat.astype(jnp.bfloat16))
    w_p = jnp.zeros((f, C_PAD), jnp.bfloat16).at[:, :c].set(
        w.astype(jnp.bfloat16))
    b_p = jnp.zeros((1, C_PAD), jnp.float32).at[:, :c].set(
        b.astype(jnp.float32))

    kernel = functools.partial(gstar_kernel, num_classes=c)
    out = pl.pallas_call(
        kernel,
        out_shape=jax.ShapeDtypeStruct((n_rows, C_PAD), jnp.float32),
        grid=(n_rows // tm, n_k // tk),
        in_specs=[
            pl.BlockSpec((tm, tk), lambda i, k: (i, k)),     # A tile
            pl.BlockSpec((tk, f), lambda i, k: (k, 0)),      # X tile (k-slab)
            pl.BlockSpec((f, C_PAD), lambda i, k: (0, 0)),   # W (resident)
            pl.BlockSpec((1, C_PAD), lambda i, k: (0, 0)),   # bias (resident)
        ],
        out_specs=pl.BlockSpec((tm, C_PAD), lambda i, k: (i, 0)),
        scratch_shapes=[pltpu.VMEM((tm, C_PAD), jnp.float32)],
        compiler_params=pltpu.CompilerParams(
            dimension_semantics=("parallel", "arbitrary")),
    )(a_p, x_p, w_p, b_p)
    return out[:n, :c]


def build_normalized_adjacency(edge_index, num_nodes):
    """Dense D^{-1/2} (A + I) D^{-1/2} from edge_index [2, E] (plain-JAX glue)."""
    # TODO(synk): for realistic graph sizes (E << N^2) replace the dense A_norm
    # with a sorted-edge gather + segment-sum Pallas kernel (scalar-prefetched
    # row offsets) to escape the O(N^2) HBM roofline.
    src, dst = edge_index[0], edge_index[1]
    adj = jnp.zeros((num_nodes, num_nodes), jnp.float32)
    adj = adj.at[dst, src].set(1.0)                 # messages flow src -> dst
    idx = jnp.arange(num_nodes)
    adj = adj.at[idx, idx].set(1.0)                 # self-loops (idempotent)
    deg = jnp.sum(adj, axis=1)
    d_inv_sqrt = jnp.where(deg > 0, 1.0 / jnp.sqrt(deg), 0.0)
    return adj * d_inv_sqrt[:, None] * d_inv_sqrt[None, :]


class GStarModelPallas:
    """Mirror of GStarModel: res = forward_function(feat, edge_index); softmax(-1)."""

    def __init__(self, w, b):
        self.w = w
        self.b = b

    def __call__(self, edge_index, feat):
        # TODO(synk): DGLGraph -> PyG conversion (from_dgl) is framework glue with
        # no Pallas equivalent; we accept edge_index directly.
        num_nodes = feat.shape[0]
        a_norm = build_normalized_adjacency(edge_index, num_nodes)
        return gstar_forward(a_norm, feat, self.w, self.b)


if __name__ == "__main__":
    key = jax.random.PRNGKey(0)
    k_feat, k_edges, k_w, k_b = jax.random.split(key, 4)

    N = 16   # nodes
    F = 32   # input feature dim
    C = 8    # output classes
    E = 48   # edges

    feat = jax.random.normal(k_feat, (N, F), dtype=jnp.float32)
    edge_index = jax.random.randint(k_edges, (2, E), 0, N, dtype=jnp.int32)

    # Deterministic synthetic parameters for the injected forward_function (GCN layer).
    w = jax.random.normal(k_w, (F, C), dtype=jnp.float32) * (1.0 / jnp.sqrt(F))
    b = jax.random.normal(k_b, (1, C), dtype=jnp.float32) * 0.01

    model = GStarModelPallas(w, b)
    out = model(edge_index, feat)
    out = jax.block_until_ready(out)

    # Reference (pure JAX, f32) — generous tolerance for bf16 inputs + approx recip.
    a_norm = build_normalized_adjacency(edge_index, N)
    ref = jax.nn.softmax(a_norm @ feat @ w + b, axis=-1)

    assert out.shape == (N, C)
    row_sums = jnp.sum(out, axis=-1)
    assert bool(jnp.allclose(row_sums, jnp.ones((N,)), atol=1e-2))
    assert bool(jnp.allclose(out, ref, atol=5e-2))

    print("KERNEL_OK")
</pallas_src>

<mosaic_0001>
module attributes {stable_mosaic.version = 11 : i64} {
  func.func @gstar_kernel(%arg0: i32, %arg1: i32, %arg2: memref<16x128xbf16, #tpu.memory_space<vmem>>, %arg3: memref<128x32xbf16, #tpu.memory_space<vmem>>, %arg4: memref<32x128xbf16, #tpu.memory_space<vmem>>, %arg5: memref<1x128xf32, #tpu.memory_space<vmem>>, %arg6: memref<16x128xf32, #tpu.memory_space<vmem>>, %arg7: memref<16x128xf32, #tpu.memory_space<vmem>>) attributes {dimension_semantics = [#tpu.dimension_semantics<parallel>, #tpu.dimension_semantics<arbitrary>], iteration_bounds = array<i64: 1, 1>, scalar_prefetch = 0 : i64, scratch_operands = 1 : i64, tpu.core_type = #tpu.core_type<tc>, window_params = [{transform_indices = @transform_0, window_bounds = array<i64: 16, 128>}, {transform_indices = @transform_1, window_bounds = array<i64: 128, 32>}, {pipeline_mode = #tpu.pipeline_mode<synchronous>, transform_indices = @transform_2, window_bounds = array<i64: 32, 128>}, {pipeline_mode = #tpu.pipeline_mode<synchronous>, transform_indices = @transform_3, window_bounds = array<i64: 1, 128>}, {transform_indices = @transform_4, window_bounds = array<i64: 16, 128>}]} {
    %c0_i32 = arith.constant 0 : i32
    %0 = arith.cmpi eq, %arg1, %c0_i32 : i32
    %1 = arith.extui %0 : i1 to i32
    %c0_i32_0 = arith.constant 0 : i32
    %2 = arith.cmpi ne, %1, %c0_i32_0 : i32
    scf.if %2 {
      %cst_13 = arith.constant 0.000000e+00 : f32
      %15 = vector.broadcast %cst_13 : f32 to vector<16x128xf32>
      %c0_14 = arith.constant 0 : index
      %c0_15 = arith.constant 0 : index
      %16 = vector.load %arg7[%c0_14, %c0_15] : memref<16x128xf32, #tpu.memory_space<vmem>>, vector<16x128xf32>
      tpu.vector_store %arg7[%c0_14, %c0_15], %15 {strides = array<i32>} : memref<16x128xf32, #tpu.memory_space<vmem>>, vector<16x128xf32>,
    } else {
    }
    %c0 = arith.constant 0 : index
    %c0_1 = arith.constant 0 : index
    %3 = vector.load %arg3[%c0, %c0_1] : memref<128x32xbf16, #tpu.memory_space<vmem>>, vector<128x32xbf16>
    %c0_2 = arith.constant 0 : index
    %c0_3 = arith.constant 0 : index
    %4 = vector.load %arg4[%c0_2, %c0_3] : memref<32x128xbf16, #tpu.memory_space<vmem>>, vector<32x128xbf16>
    %cst = arith.constant dense<0.000000e+00> : vector<128x128xf32>
    %5 = tpu.matmul %3, %4, %cst {dimension_numbers = #tpu.dot_dimension_numbers<[1], [0], [0], [1], [0, 0, 1, 1], [], []>} : vector<128x32xbf16>, vector<32x128xbf16>, vector<128x128xf32> -> vector<128x128xf32>
    %c0_4 = arith.constant 0 : index
    %c0_5 = arith.constant 0 : index
    %6 = vector.load %arg7[%c0_4, %c0_5] : memref<16x128xf32, #tpu.memory_space<vmem>>, vector<16x128xf32>
    %c0_6 = arith.constant 0 : index
    %c0_7 = arith.constant 0 : index
    %7 = vector.load %arg2[%c0_6, %c0_7] : memref<16x128xbf16, #tpu.memory_space<vmem>>, vector<16x128xbf16>
    %8 = arith.truncf %5 : vector<128x128xf32> to vector<128x128xbf16>
    %cst_8 = arith.constant dense<0.000000e+00> : vector<16x128xf32>
    %9 = tpu.matmul %7, %8, %cst_8 {dimension_numbers = #tpu.dot_dimension_numbers<[1], [0], [0], [1], [0, 0, 1, 1], [], []>} : vector<16x128xbf16>, vector<128x128xbf16>, vector<16x128xf32> -> vector<16x128xf32>
    %10 = arith.addf %6, %9 : vector<16x128xf32>
    %c0_9 = arith.constant 0 : index
    %c0_10 = arith.constant 0 : index
    %11 = vector.load %arg7[%c0_9, %c0_10] : memref<16x128xf32, #tpu.memory_space<vmem>>, vector<16x128xf32>
    tpu.vector_store %arg7[%c0_9, %c0_10], %10 {strides = array<i32>} : memref<16x128xf32, #tpu.memory_space<vmem>>, vector<16x128xf32>,
    %c0_i32_11 = arith.constant 0 : i32
    %12 = arith.cmpi eq, %arg1, %c0_i32_11 : i32
    %13 = arith.extui %12 : i1 to i32
    %c0_i32_12 = arith.constant 0 : i32
    %14 = arith.cmpi ne, %13, %c0_i32_12 : i32
    scf.if %14 {
      %c0_13 = arith.constant 0 : index
      %c0_14 = arith.constant 0 : index
      %15 = vector.load %arg7[%c0_13, %c0_14] : memref<16x128xf32, #tpu.memory_space<vmem>>, vector<16x128xf32>
      %c0_15 = arith.constant 0 : index
      %c0_16 = arith.constant 0 : index
      %16 = vector.load %arg5[%c0_15, %c0_16] : memref<1x128xf32, #tpu.memory_space<vmem>>, vector<1x128xf32>
      %17 = vector.broadcast %16 : vector<1x128xf32> to vector<16x128xf32>
      %18 = arith.addf %15, %17 : vector<16x128xf32>
      %19 = tpu.iota {dimensions = array<i32: 1>} : vector<16x128xi32>
      %c8_i32 = arith.constant 8 : i32
      %20 = vector.broadcast %c8_i32 : i32 to vector<16x128xi32>
      %21 = arith.cmpi slt, %19, %20 : vector<16x128xi32>
      %cst_17 = arith.constant 0xFF800000 : f32
      %22 = vector.broadcast %cst_17 : f32 to vector<16x128xf32>
      %23 = arith.select %21, %18, %22 : vector<16x128xi1>, vector<16x128xf32>
      %cst_18 = arith.constant dense<0xFF800000> : vector<16xf32>
      %24 = vector.multi_reduction <maximumf>, %23, %cst_18 [1] : vector<16x128xf32> to vector<16xf32>
      %25 = vector.shape_cast %24 : vector<16xf32> to vector<16x1xf32>
      %26 = vector.broadcast %25 : vector<16x1xf32> to vector<16x128xf32>
      %27 = arith.subf %23, %26 : vector<16x128xf32>
      %28 = math.exp %27 : vector<16x128xf32>
      %cst_19 = arith.constant dense<0.000000e+00> : vector<16xf32>
      %29 = vector.multi_reduction <add>, %28, %cst_19 [1] : vector<16x128xf32> to vector<16xf32>
      %30 = vector.shape_cast %29 : vector<16xf32> to vector<16x1xf32>
      %31 = tpu.reciprocal %30 {approx = true} : vector<16x1xf32> -> vector<16x1xf32>
      %32 = vector.broadcast %31 : vector<16x1xf32> to vector<16x128xf32>
      %33 = arith.mulf %28, %32 : vector<16x128xf32>
      %c0_20 = arith.constant 0 : index
      %c0_21 = arith.constant 0 : index
      %34 = vector.load %arg6[%c0_20, %c0_21] : memref<16x128xf32, #tpu.memory_space<vmem>>, vector<16x128xf32>
      tpu.vector_store %arg6[%c0_20, %c0_21], %33 {strides = array<i32>} : memref<16x128xf32, #tpu.memory_space<vmem>>, vector<16x128xf32>,
    } else {
    }
    return
  }
  func.func @transform_0(%arg0: i32, %arg1: i32) -> (i32, i32) {
    %c0_i32 = arith.constant 0 : i32
    return %arg0, %arg1 : i32, i32
  }
  func.func @transform_1(%arg0: i32, %arg1: i32) -> (i32, i32) {
    %c0_i32 = arith.constant 0 : i32
    %c0_i32_0 = arith.constant 0 : i32
    return %arg1, %c0_i32 : i32, i32
  }
  func.func @transform_2(%arg0: i32, %arg1: i32) -> (i32, i32) {
    %c0_i32 = arith.constant 0 : i32
    %c0_i32_0 = arith.constant 0 : i32
    %c0_i32_1 = arith.constant 0 : i32
    return %c0_i32, %c0_i32_0 : i32, i32
  }
  func.func @transform_3(%arg0: i32, %arg1: i32) -> (i32, i32) {
    %c0_i32 = arith.constant 0 : i32
    %c0_i32_0 = arith.constant 0 : i32
    %c0_i32_1 = arith.constant 0 : i32
    return %c0_i32, %c0_i32_0 : i32, i32
  }
  func.func @transform_4(%arg0: i32, %arg1: i32) -> (i32, i32) {
    %c0_i32 = arith.constant 0 : i32
    %c0_i32_0 = arith.constant 0 : i32
    return %arg0, %c0_i32 : i32, i32
  }
}

</mosaic_0001>

<llo_original>
// kernel: tpu_custom_call.1
$region0: #{tpu_custom_call.1}
  #allocation0 [shape = 'u32[]', space=smem, size = 0x4, offset = 0x4, fixed_abs, tag = 'smem constant byte address 0x4 - core index']
  #allocation1 [shape = 'u32[144,128]{1,0:T(1,128)}', space=vmem, size = 0x12000, scoped, tag = 'internal scratch']
  #allocation2 [shape = 'f32[16,128]{1,0:T(8,128)}', space=vmem, size = 0x2000, scoped, tag = 'scratch operand']
  %s0 = inlined_call_operand.vmem [shape: bf16[16,128], index: 0, kind: input, shape index: {}]
  %s1 = inlined_call_operand.vmem [shape: bf16[128,32], index: 1, kind: input, shape index: {}]
  %s2 = inlined_call_operand.vmem [shape: bf16[32,128], index: 2, kind: input, shape index: {}]
  %s3 = inlined_call_operand.vmem [shape: f32[1,128], index: 3, kind: input, shape index: {}]
  %s4 = inlined_call_operand.hbm [shape: f32[16,128], index: 4, kind: output, shape index: {}]
  %s5 = sld [smem:[#allocation0]]
  $region34: #{tpu_custom_call.1} parent=0
    _
  %s7 = ssub.s32 1, %s5
  %s8 = scalar_select 0, %s7, %s5
  $region1: #{tpu_custom_call.1} parent=0
    #allocation3 [shape = 'u8[8192]{0}', space=vmem, size = 0x2000, scoped, tag = 'output window, operand 0, single buffered']
    #allocation4 [shape = 's32[1]{0}', space=sflag, size = 0x4, scoped, tag = 'scoped memory for tpu_custom_call.1']
    %9 = vsyncpa [#allocation4], 0
    // Predicated region
    $region2: #{tpu_custom_call.1} parent=1 // pred_check
      _
    $region3: #{tpu_custom_call.1} parent=1 // pred_check_branch
      %11 = sbr.rel (0) target = $region5
    $region4: #{tpu_custom_call.1} parent=1 // pred_region
      _
    $region5: #{tpu_custom_call.1} parent=1 // pred_fallthru
      _
    // Predicated region
    $region6: #{tpu_custom_call.1} parent=1 // pred_check
      _
    $region7: #{tpu_custom_call.1} parent=1 // pred_check_branch
      %13 = sbr.rel (0) target = $region9
    $region8: #{tpu_custom_call.1} parent=1 // pred_region
      _
    $region9: #{tpu_custom_call.1} parent=1 // pred_fallthru
      _
    // Predicated region
    $region10: #{tpu_custom_call.1} parent=1 // pred_check
      _
    $region11: #{tpu_custom_call.1} parent=1 // pred_check_branch
      %15 = sbr.rel (0) target = $region13
    $region12: #{tpu_custom_call.1} parent=1 // pred_region
      _
    $region13: #{tpu_custom_call.1} parent=1 // pred_fallthru
      _
    // Predicated region
    $region14: #{tpu_custom_call.1} parent=1 // pred_check
      _
    $region15: #{tpu_custom_call.1} parent=1 // pred_check_branch
      %17 = sbr.rel (0) target = $region17
    $region16: #{tpu_custom_call.1} parent=1 // pred_region
      _
    $region17: #{tpu_custom_call.1} parent=1 // pred_fallthru
      _
    %p19 = scmp.eq.s32.totalorder 0, 0
    // Predicated region
    $region18: #{tpu_custom_call.1} parent=1 // pred_check
      %p20 = pneg %p19
    $region19: #{tpu_custom_call.1} parent=1 // pred_check_branch
      %22 = sbr.rel (%p20) target = $region21
    $region20: #{tpu_custom_call.1} parent=1 // pred_region
      %23 = vst [vmem:[#allocation2] sm:$0xff] 0.0
      %24 = vst [vmem:[#allocation2 + $0x8] sm:$0xff] 0.0
    $region21: #{tpu_custom_call.1} parent=1 // pred_fallthru
      _
    %v25 = vld [vmem:[%s1] sm:$0xf]
    %v26 = vld [vmem:[%s1 + $0x4] sm:$0xf]
    %v27 = vld [vmem:[%s1 + $0x8] sm:$0xf]
    %v28 = vld [vmem:[%s1 + $0xc] sm:$0xf]
    %v29 = vld [vmem:[%s1 + $0x10] sm:$0xf]
    %v30 = vld [vmem:[%s1 + $0x14] sm:$0xf]
    %v31 = vld [vmem:[%s1 + $0x18] sm:$0xf]
    %v32 = vld [vmem:[%s1 + $0x1c] sm:$0xf]
    %v33 = vld [vmem:[%s1 + $0x20] sm:$0xf]
    %v34 = vld [vmem:[%s1 + $0x24] sm:$0xf]
    %v35 = vld [vmem:[%s1 + $0x28] sm:$0xf]
    %v36 = vld [vmem:[%s1 + $0x2c] sm:$0xf]
    %v37 = vld [vmem:[%s1 + $0x30] sm:$0xf]
    %v38 = vld [vmem:[%s1 + $0x34] sm:$0xf]
    %v39 = vld [vmem:[%s1 + $0x38] sm:$0xf]
    %v40 = vld [vmem:[%s1 + $0x3c] sm:$0xf]
    %v41 = vld [vmem:[%s2] sm:$0xf]
    %v42 = vld [vmem:[%s2 + $0x4] sm:$0xf]
    %v43 = vld [vmem:[%s2 + $0x8] sm:$0xf]
    %v44 = vld [vmem:[%s2 + $0xc] sm:$0xf]
    %v61 = vunpack.c.l.b16 %v25
    %v62 = vunpack.c.l.b16 %v26
    %v63 = vunpack.c.l.b16 %v27
    %v64 = vunpack.c.l.b16 %v28
    %v65 = vunpack.c.l.b16 %v29
    %v66 = vunpack.c.l.b16 %v30
    %v67 = vunpack.c.l.b16 %v31
    %v68 = vunpack.c.l.b16 %v32
    %v69 = vunpack.c.l.b16 %v33
    %v70 = vunpack.c.l.b16 %v34
    %v71 = vunpack.c.l.b16 %v35
    %v72 = vunpack.c.l.b16 %v36
    %v73 = vunpack.c.l.b16 %v37
    %v74 = vunpack.c.l.b16 %v38
    %v75 = vunpack.c.l.b16 %v39
    %v76 = vunpack.c.l.b16 %v40
    %v77 = vpack.c.b16 %v62, %v61
    %v78 = vpack.c.b16 %v64, %v63
    %v79 = vpack.c.b16 %v66, %v65
    %v80 = vpack.c.b16 %v68, %v67
    %v81 = vpack.c.b16 %v70, %v69
    %v82 = vpack.c.b16 %v72, %v71
    %v83 = vpack.c.b16 %v74, %v73
    %v84 = vpack.c.b16 %v76, %v75
    %v89 = vunpack.c.l.b16 %v41
    %v90 = vunpack.c.l.b16 %v42
    %v91 = vunpack.c.l.b16 %v43
    %v92 = vunpack.c.l.b16 %v44
    %v93 = vpack.c.b16 %v90, %v89
    %v94 = vpack.c.b16 %v92, %v91
    %vm97 = vcmask 261120
    %v99 = vsel %vm97, %v77, 0
    %v102 = vsel %vm97, %v78, 0
    %v105 = vsel %vm97, %v79, 0
    %v108 = vsel %vm97, %v80, 0
    %v111 = vsel %vm97, %v81, 0
    %v114 = vsel %vm97, %v82, 0
    %v117 = vsel %vm97, %v83, 0
    %v120 = vsel %vm97, %v84, 0
    %122 = vmatprep.subr.bf16.mxu0 0
    %123 = vmatpush1.bf16.msra.mxu0 %v93
    %124 = vmatprep.subr.bf16.mxu0 0
    %125 = vmatpush1.bf16.msra.mxu0 %v94
    %126 = vmatprep.subr.bf16.mxu0 0
    %127 = vmatpush1.bf16.msra.mxu0 0
    %128 = vmatprep.subr.bf16.mxu0 0
    %129 = vmatpush1.bf16.msra.mxu0 0
    %130 = vmatprep.subr.bf16.mxu0 0
    %131 = vmatpush1.bf16.msra.mxu0 0
    %132 = vmatprep.subr.bf16.mxu0 0
    %133 = vmatpush1.bf16.msra.mxu0 0
    %134 = vmatprep.subr.bf16.mxu0 0
    %135 = vmatpush1.bf16.msra.mxu0 0
    %136 = vmatprep.subr.bf16.mxu0 0
    %137 = vmatpush1.bf16.msra.mxu0 0
    %138 = vmatprep.subr.bf16.mxu0 0
    %139 = vmatpush1.bf16.msra.mxu0 0
    %140 = vmatprep.subr.bf16.mxu0 0
    %141 = vmatpush1.bf16.msra.mxu0 0
    %142 = vmatprep.subr.bf16.mxu0 0
    %143 = vmatpush1.bf16.msra.mxu0 0
    %144 = vmatprep.subr.bf16.mxu0 0
    %145 = vmatpush1.bf16.msra.mxu0 0
    %146 = vmatprep.subr.bf16.mxu0 0
    %147 = vmatpush1.bf16.msra.mxu0 0
    %148 = vmatprep.subr.bf16.mxu0 0
    %149 = vmatpush1.bf16.msra.mxu0 0
    %150 = vmatprep.subr.bf16.mxu0 0
    %151 = vmatpush1.bf16.msra.mxu0 0
    %152 = vmatprep.subr.bf16.mxu0 0
    %153 = vmatpush1.bf16.msra.mxu0 0
    %154 = vmatprep.mubr.bf16.mxu0 0
    %155 = vmatmul.mubr.bf16.gmra.mrb[0].mxu0 %v99
    %v156 = vpop.f32.mrb[0].mxu0
    %v157 = vadd.f32 0.0, %v156
    %v158 = vpop.f32.mrb[0].mxu0
    %v159 = vpop.f32.mrb[0].mxu0
    %v160 = vadd.f32 0.0, %v159
    %v161 = vpop.f32.mrb[0].mxu0
    %162 = vmatprep.mubr.bf16.mxu0 0
    %163 = vmatmul.mubr.bf16.gmra.mrb[0].mxu0 %v102
    %v164 = vpop.f32.mrb[0].mxu0
    %v165 = vadd.f32 0.0, %v164
    %v166 = vpop.f32.mrb[0].mxu0
    %v167 = vpop.f32.mrb[0].mxu0
    %v168 = vadd.f32 0.0, %v167
    %v169 = vpop.f32.mrb[0].mxu0
    %170 = vmatprep.mubr.bf16.mxu0 0
    %171 = vmatmul.mubr.bf16.gmra.mrb[0].mxu0 %v105
    %v172 = vpop.f32.mrb[0].mxu0
    %v173 = vadd.f32 0.0, %v172
    %v174 = vpop.f32.mrb[0].mxu0
    %v175 = vpop.f32.mrb[0].mxu0
    %v176 = vadd.f32 0.0, %v175
    %v177 = vpop.f32.mrb[0].mxu0
    %178 = vmatprep.mubr.bf16.mxu0 0
    %179 = vmatmul.mubr.bf16.gmra.mrb[0].mxu0 %v108
    %v180 = vpop.f32.mrb[0].mxu0
    %v181 = vadd.f32 0.0, %v180
    %v182 = vpop.f32.mrb[0].mxu0
    %v183 = vpop.f32.mrb[0].mxu0
    %v184 = vadd.f32 0.0, %v183
    %v185 = vpop.f32.mrb[0].mxu0
    %186 = vmatprep.mubr.bf16.mxu0 0
    %187 = vmatmul.mubr.bf16.gmra.mrb[0].mxu0 %v111
    %v188 = vpop.f32.mrb[0].mxu0
    %v189 = vadd.f32 0.0, %v188
    %v190 = vpop.f32.mrb[0].mxu0
    %v191 = vpop.f32.mrb[0].mxu0
    %v192 = vadd.f32 0.0, %v191
    %v193 = vpop.f32.mrb[0].mxu0
    %194 = vmatprep.mubr.bf16.mxu0 0
    %195 = vmatmul.mubr.bf16.gmra.mrb[0].mxu0 %v114
    %v196 = vpop.f32.mrb[0].mxu0
    %v197 = vadd.f32 0.0, %v196
    %v198 = vpop.f32.mrb[0].mxu0
    %v199 = vpop.f32.mrb[0].mxu0
    %v200 = vadd.f32 0.0, %v199
    %v201 = vpop.f32.mrb[0].mxu0
    %202 = vmatprep.mubr.bf16.mxu0 0
    %203 = vmatmul.mubr.bf16.gmra.mrb[0].mxu0 %v117
    %v204 = vpop.f32.mrb[0].mxu0
    %v205 = vadd.f32 0.0, %v204
    %v206 = vpop.f32.mrb[0].mxu0
    %v207 = vpop.f32.mrb[0].mxu0
    %v208 = vadd.f32 0.0, %v207
    %v209 = vpop.f32.mrb[0].mxu0
    %210 = vmatprep.mubr.bf16.mxu0 0
    %211 = vmatmul.mubr.bf16.gmra.mrb[0].mxu0 %v120
    %v212 = vpop.f32.mrb[0].mxu0
    %v213 = vadd.f32 0.0, %v212
    %v214 = vpop.f32.mrb[0].mxu0
    %v215 = vpop.f32.mrb[0].mxu0
    %v216 = vadd.f32 0.0, %v215
    %v217 = vpop.f32.mrb[0].mxu0
    %218 = vdwg.mxu0
    %v219 = vld [vmem:[#allocation2] sm:$0xff]
    %v220 = vld [vmem:[#allocation2 + $0x8] sm:$0xff]
    %v221 = vld [vmem:[%s0] sm:$0xf]
    %v222 = vld [vmem:[%s0 + $0x4] sm:$0xf]
    %v223 = vpack.c.bf16 %v160, %v157
    %v224 = vpack.c.bf16 %v168, %v165
    %v225 = vpack.c.bf16 %v176, %v173
    %v226 = vpack.c.bf16 %v184, %v181
    %v227 = vpack.c.bf16 %v192, %v189
    %v228 = vpack.c.bf16 %v200, %v197
    %v229 = vpack.c.bf16 %v208, %v205
    %v230 = vpack.c.bf16 %v216, %v213
    %v233 = vunpack.c.l.b16 %v221
    %v234 = vunpack.c.l.b16 %v222
    %v235 = vpack.c.b16 %v234, %v233
    %237 = vmatprep.subr.bf16.mxu0 0
    %238 = vmatpush1.bf16.msra.mxu0 %v223
    %239 = vmatprep.subr.bf16.mxu0 0
    %240 = vmatpush1.bf16.msra.mxu0 %v224
    %241 = vmatprep.subr.bf16.mxu0 0
    %242 = vmatpush1.bf16.msra.mxu0 %v225
    %243 = vmatprep.subr.bf16.mxu0 0
    %244 = vmatpush1.bf16.msra.mxu0 %v226
    %245 = vmatprep.subr.bf16.mxu0 0
    %246 = vmatpush1.bf16.msra.mxu0 %v227
    %247 = vmatprep.subr.bf16.mxu0 0
    %248 = vmatpush1.bf16.msra.mxu0 %v228
    %249 = vmatprep.subr.bf16.mxu0 0
    %250 = vmatpush1.bf16.msra.mxu0 %v229
    %251 = vmatprep.subr.bf16.mxu0 0
    %252 = vmatpush1.bf16.msra.mxu0 %v230
    %253 = vmatprep.subr.bf16.mxu0 0
    %254 = vmatpush1.bf16.msra.mxu0 0
    %255 = vmatprep.subr.bf16.mxu0 0
    %256 = vmatpush1.bf16.msra.mxu0 0
    %257 = vmatprep.subr.bf16.mxu0 0
    %258 = vmatpush1.bf16.msra.mxu0 0
    %259 = vmatprep.subr.bf16.mxu0 0
    %260 = vmatpush1.bf16.msra.mxu0 0
    %261 = vmatprep.subr.bf16.mxu0 0
    %262 = vmatpush1.bf16.msra.mxu0 0
    %263 = vmatprep.subr.bf16.mxu0 0
    %264 = vmatpush1.bf16.msra.mxu0 0
    %265 = vmatprep.subr.bf16.mxu0 0
    %266 = vmatpush1.bf16.msra.mxu0 0
    %267 = vmatprep.subr.bf16.mxu0 0
    %268 = vmatpush1.bf16.msra.mxu0 0
    %269 = vmatprep.mubr.bf16.mxu0 0
    %270 = vmatmul.mubr.bf16.gmra.mrb[0].mxu0 %v235
    %v271 = vpop.f32.mrb[0].mxu0
    %v272 = vadd.f32 0.0, %v271
    %v273 = vpop.f32.mrb[0].mxu0
    %v274 = vpop.f32.mrb[0].mxu0
    %v275 = vadd.f32 0.0, %v274
    %v276 = vpop.f32.mrb[0].mxu0
    %277 = vdwg.mxu0
    %v278 = vadd.f32 %v219, %v272
    %v279 = vadd.f32 %v220, %v275
    %280 = vst [vmem:[#allocation2] sm:$0xff] %v278
    %281 = vst [vmem:[#allocation2 + $0x8] sm:$0xff] %v279
    // Predicated region
    $region22: #{tpu_custom_call.1} parent=1 // pred_check
      %p282 = pneg %p19
    $region23: #{tpu_custom_call.1} parent=1 // pred_check_branch
      %284 = sbr.rel (%p282) target = $region25
    $region24: #{tpu_custom_call.1} parent=1 // pred_region
      %v285 = vld [vmem:[#allocation2] sm:$0xff]
      %v286 = vld [vmem:[#allocation2 + $0x8] sm:$0xff]
      %v287 = vld [vmem:[%s3] sm:$0x1]
      %v289 = vlaneseq
      %v290 = vshrl.u32 %v289, 7
      %v291 = vsub.s32 0, %v290
      %v292 = vrot.slane %v287, %v291
      %v294 = vadd.f32 %v285, %v292
      %v295 = vadd.f32 %v286, %v292
      %v296 = vlaneseq
      %v297 = vand.u32 %v296, 127
      %vm298 = vcmp.lt.s32.totalorder %v297, 8
      %v299 = vsel %vm298, %v294, -inf
      %v300 = vsel %vm298, %v295, -inf
      %301 = vmax.xlane.f32.xlu0 %v299
      %v302 = vpop.xlane.xlu0 %301
      %303 = vmax.xlane.f32.xlu0 %v300
      %v304 = vpop.xlane.xlu0 %303
      %v305 = vsub.f32 %v299, %v302
      %v306 = vsub.f32 %v300, %v304
      %v307 = vmul.f32 %v305, 1.442695
      %v308 = vpow.pop %v307
      %v309 = vmul.f32 %v306, 1.442695
      %v310 = vpow.pop %v309
      %311 = vadd.xlane.f32.xlu0 %v308
      %v312 = vpop.xlane.xlu0 %311
      %313 = vadd.xlane.f32.xlu0 %v310
      %v314 = vpop.xlane.xlu0 %313
      %v315 = vrcp.pop %v312
      %v316 = vrcp.pop %v314
      %v317 = vmul.f32 %v308, %v315
      %v318 = vmul.f32 %v310, %v316
      %319 = vst [vmem:[#allocation3] sm:$0xff] %v317
      %320 = vst [vmem:[#allocation3 + $0x8] sm:$0xff] %v318
    $region25: #{tpu_custom_call.1} parent=1 // pred_fallthru
      _
    // Predicated region
    $region26: #{tpu_custom_call.1} parent=1 // pred_check
      _
    $region27: #{tpu_custom_call.1} parent=1 // pred_check_branch
      %322 = sbr.rel (0) target = $region29
    $region28: #{tpu_custom_call.1} parent=1 // pred_region
      %s324 = ssub.s32 256, 256
      %325 = vsyncadd [#allocation4], %s324
      %s326 = sshll.u32 [#allocation3], 4
      %s327 = int_to_ptr.vmem [resolvable:$true] %s326
      %332 = dma.vmem_to_hbm [thread:$0]  %s327, 256, %s4, [#allocation4], 128, 128, 8
    $region29: #{tpu_custom_call.1} parent=1 // pred_fallthru
      _
    // Predicated region
    $region30: #{tpu_custom_call.1} parent=1 // pred_check
      _
    $region31: #{tpu_custom_call.1} parent=1 // pred_check_branch
      %334 = sbr.rel (0) target = $region33
    $region32: #{tpu_custom_call.1} parent=1 // pred_region
      %335 = dma.done [#allocation4], 256
    $region33: #{tpu_custom_call.1} parent=1 // pred_fallthru
      _
    %336 = vsyncpa [#allocation4], 1

</llo_original>
